<compile_context>
chip_gen: v7x
topology: tpu7x:2x2x1
jax: 0.10.0
libtpu: 0.0.40
codegen_flags: <defaults>
</compile_context>

<pallas_src>
import jax
import jax.numpy as jnp
from jax.experimental import pallas as pl
from jax.experimental.pallas import tpu as pltpu

BN_EPS = 1e-5


# --------------------------------------------------------------------------- #
# Kernels
# --------------------------------------------------------------------------- #
def _bottleneck_bn(x_ref, w1_ref, gamma_ref, beta_ref):
    """Linear(input_dim -> num_bottleneck) + training-mode BatchNorm1d."""
    # bf16 inputs, f32 accumulation on the MXU.  The Linear bias b1 is omitted:
    # training-mode BatchNorm subtracts the per-feature batch mean, so a pre-BN
    # bias cancels exactly.
    h = jnp.dot(x_ref[0], w1_ref[0], preferred_element_type=jnp.float32)

    # BatchNorm1d (training): batch mean / biased variance, fused into a single
    # per-feature scale/shift so the per-element work is one FMA.
    mean = jnp.mean(h, axis=0, keepdims=True)
    mean_sq = jnp.mean(h * h, axis=0, keepdims=True)
    var = mean_sq - mean * mean
    scale = gamma_ref[0] * jax.lax.rsqrt(var + BN_EPS)   # rsqrt -> EUP slot
    shift = beta_ref[0] - mean * scale
    return h * scale + shift


def _classifier(hn, w2_ref, b2_ref):
    """Linear(num_bottleneck -> padded class_num), bf16 MXU matmul, f32 acc."""
    return (
        jnp.dot(hn.astype(jnp.bfloat16), w2_ref[0],
                preferred_element_type=jnp.float32)
        + b2_ref[0]
    )


def _class_block_kernel(x_ref, w1_ref, gamma_ref, beta_ref, w2_ref, b2_ref,
                        logits_ref):
    hn = _bottleneck_bn(x_ref, w1_ref, gamma_ref, beta_ref)
    logits_ref[0] = _classifier(hn, w2_ref, b2_ref)


def _class_block_kernel_with_feat(x_ref, w1_ref, gamma_ref, beta_ref, w2_ref,
                                  b2_ref, logits_ref, feat_ref):
    hn = _bottleneck_bn(x_ref, w1_ref, gamma_ref, beta_ref)
    feat_ref[0] = hn
    logits_ref[0] = _classifier(hn, w2_ref, b2_ref)


# --------------------------------------------------------------------------- #
# Parameter preparation (one-time, hoisted out of the forward call)
# --------------------------------------------------------------------------- #
def prepare_class_block_params(params, lane_multiple=128):
    """Transpose to (in, out), pad class dim to a lane-dense multiple of 128,
    cast matmul operands to bf16 and add a leading stack axis (P=1).

    On v6e/v7x, lane_multiple=256 fills the 256-wide MXU for the classifier.
    """
    w1, b1, gamma, beta, w2, b2 = params
    del b1  # pre-BN bias cancels under batch-stat BatchNorm (see kernel).
    nb, _ = w1.shape
    c = w2.shape[0]
    c_pad = ((c + lane_multiple - 1) // lane_multiple) * lane_multiple

    w1_t = w1.T.astype(jnp.bfloat16)[None]                       # (1, d_in, nb)
    gamma_r = gamma.reshape(1, 1, nb).astype(jnp.float32)
    beta_r = beta.reshape(1, 1, nb).astype(jnp.float32)
    w2_t = jnp.zeros((nb, c_pad), jnp.float32).at[:, :c].set(w2.T)
    w2_t = w2_t.astype(jnp.bfloat16)[None]                       # (1, nb, c_pad)
    b2_p = jnp.zeros((1, 1, c_pad), jnp.float32).at[0, 0, :c].set(b2)
    return (w1_t, gamma_r, beta_r, w2_t, b2_p, c)


# --------------------------------------------------------------------------- #
# Forward wrapper
# --------------------------------------------------------------------------- #
def class_block_forward(x, prepared, training=True, return_f=False):
    """Fused ClassBlock forward.

    x: (B, input_dim) for a single block, or (P, B, input_dim) for P stacked
       FSRA region blocks (prepared params must carry a matching leading P).
    """
    w1_t, gamma, beta, w2_t, b2, class_num = prepared
    squeeze = x.ndim == 2
    if squeeze:
        x = x[None]
    P, B, d_in = x.shape
    nb = w1_t.shape[-1]
    c_pad = w2_t.shape[-1]

    x_bf16 = x.astype(jnp.bfloat16)
    need_feat = return_f or (not training)

    def spec3(shape):
        return pl.BlockSpec(shape, lambda p: (p, 0, 0))

    in_specs = [
        spec3((1, B, d_in)),      # x (bf16)
        spec3((1, d_in, nb)),     # W1^T (bf16)
        spec3((1, 1, nb)),        # gamma
        spec3((1, 1, nb)),        # beta
        spec3((1, nb, c_pad)),    # W2^T padded (bf16)
        spec3((1, 1, c_pad)),     # b2 padded
    ]
    logits_spec = spec3((1, B, c_pad))
    logits_shape = jax.ShapeDtypeStruct((P, B, c_pad), jnp.float32)
    compiler_params = pltpu.CompilerParams(dimension_semantics=("parallel",))

    if need_feat:
        logits_pad, feat = pl.pallas_call(
            _class_block_kernel_with_feat,
            grid=(P,),
            in_specs=in_specs,
            out_specs=(logits_spec, spec3((1, B, nb))),
            out_shape=(logits_shape,
                       jax.ShapeDtypeStruct((P, B, nb), jnp.float32)),
            compiler_params=compiler_params,
        )(x_bf16, w1_t, gamma, beta, w2_t, b2)
    else:
        logits_pad = pl.pallas_call(
            _class_block_kernel,
            grid=(P,),
            in_specs=in_specs,
            out_specs=logits_spec,
            out_shape=logits_shape,
            compiler_params=compiler_params,
        )(x_bf16, w1_t, gamma, beta, w2_t, b2)
        feat = None

    logits = logits_pad[..., :class_num]   # strip lane padding
    if squeeze:
        logits = logits[0]
        if feat is not None:
            feat = feat[0]

    if training:
        return (logits, feat) if return_f else logits
    return feat   # TODO(synk): should use BN running stats in eval mode.


# --------------------------------------------------------------------------- #
# Init (matches weights_init_kaiming / weights_init_classifier) and reference
# --------------------------------------------------------------------------- #
def init_class_block_params(key, input_dim, class_num, num_bottleneck):
    k1, k2 = jax.random.split(key)
    # Linear1: kaiming_normal_(a=0, mode='fan_out') -> std = sqrt(2 / fan_out)
    std1 = (2.0 / num_bottleneck) ** 0.5
    w1 = std1 * jax.random.normal(k1, (num_bottleneck, input_dim), jnp.float32)
    b1 = jnp.zeros((num_bottleneck,), jnp.float32)
    gamma = jnp.ones((num_bottleneck,), jnp.float32)
    beta = jnp.zeros((num_bottleneck,), jnp.float32)
    # Classifier Linear: normal std=0.001, bias 0
    w2 = 0.001 * jax.random.normal(k2, (class_num, num_bottleneck), jnp.float32)
    b2 = jnp.zeros((class_num,), jnp.float32)
    return (w1, b1, gamma, beta, w2, b2)


def class_block_reference(x, params):
    """Pure-JAX f32 reference of the training-mode forward."""
    w1, b1, gamma, beta, w2, b2 = params
    h = x @ w1.T + b1
    mean = jnp.mean(h, axis=0, keepdims=True)
    var = jnp.mean((h - mean) ** 2, axis=0, keepdims=True)
    hn = (h - mean) / jnp.sqrt(var + BN_EPS) * gamma + beta
    return hn @ w2.T + b2, hn


# --------------------------------------------------------------------------- #
# Demo / correctness check
# --------------------------------------------------------------------------- #
if __name__ == "__main__":
    B, INPUT_DIM, NUM_BOTTLENECK, CLASS_NUM = 8, 64, 128, 32

    key = jax.random.PRNGKey(0)
    kx, kp = jax.random.split(key)
    x = jax.random.normal(kx, (B, INPUT_DIM), jnp.float32)
    params = init_class_block_params(kp, INPUT_DIM, CLASS_NUM, NUM_BOTTLENECK)
    prepared = prepare_class_block_params(params)   # one-time prep

    ref_logits, ref_feat = class_block_reference(x, params)

    # Training path, return_f=False: logits-only kernel (no feat writeback).
    logits = class_block_forward(x, prepared, training=True, return_f=False)
    logits = jax.block_until_ready(logits)
    assert logits.shape == (B, CLASS_NUM)
    # bf16 matmuls with f32 accumulation -> compare to f32 ref with loose tol.
    assert jnp.allclose(logits, ref_logits, atol=5e-3), "logits mismatch vs reference"

    # Training path, return_f=True: two-output kernel (logits + feature).
    logits2, feat = class_block_forward(x, prepared, training=True, return_f=True)
    logits2, feat = jax.block_until_ready((logits2, feat))
    assert logits2.shape == (B, CLASS_NUM) and feat.shape == (B, NUM_BOTTLENECK)
    assert jnp.allclose(logits2, ref_logits, atol=5e-3), "logits (return_f) mismatch"
    assert jnp.allclose(feat, ref_feat, atol=5e-2), "feature mismatch vs reference"

    print("KERNEL_OK")
</pallas_src>

<mosaic_0001>
module attributes {stable_mosaic.version = 11 : i64} {
  func.func @_class_block_kernel(%arg0: i32, %arg1: memref<1x8x64xbf16, #tpu.memory_space<vmem>>, %arg2: memref<1x64x128xbf16, #tpu.memory_space<vmem>>, %arg3: memref<1x1x128xf32, #tpu.memory_space<vmem>>, %arg4: memref<1x1x128xf32, #tpu.memory_space<vmem>>, %arg5: memref<1x128x128xbf16, #tpu.memory_space<vmem>>, %arg6: memref<1x1x128xf32, #tpu.memory_space<vmem>>, %arg7: memref<1x8x128xf32, #tpu.memory_space<vmem>>) attributes {dimension_semantics = [#tpu.dimension_semantics<parallel>], iteration_bounds = array<i64: 1>, scalar_prefetch = 0 : i64, scratch_operands = 0 : i64, tpu.core_type = #tpu.core_type<tc>, window_params = [{transform_indices = @transform_0, window_bounds = array<i64: 1, 8, 64>}, {transform_indices = @transform_1, window_bounds = array<i64: 1, 64, 128>}, {transform_indices = @transform_2, window_bounds = array<i64: 1, 1, 128>}, {transform_indices = @transform_3, window_bounds = array<i64: 1, 1, 128>}, {transform_indices = @transform_4, window_bounds = array<i64: 1, 128, 128>}, {transform_indices = @transform_5, window_bounds = array<i64: 1, 1, 128>}, {transform_indices = @transform_6, window_bounds = array<i64: 1, 8, 128>}]} {
    %c0 = arith.constant 0 : index
    %c0_0 = arith.constant 0 : index
    %c0_1 = arith.constant 0 : index
    %0 = vector.load %arg1[%c0, %c0_0, %c0_1] : memref<1x8x64xbf16, #tpu.memory_space<vmem>>, vector<1x8x64xbf16>
    %1 = vector.shape_cast %0 : vector<1x8x64xbf16> to vector<8x64xbf16>
    %c0_2 = arith.constant 0 : index
    %c0_3 = arith.constant 0 : index
    %c0_4 = arith.constant 0 : index
    %2 = vector.load %arg2[%c0_2, %c0_3, %c0_4] : memref<1x64x128xbf16, #tpu.memory_space<vmem>>, vector<1x64x128xbf16>
    %3 = vector.shape_cast %2 : vector<1x64x128xbf16> to vector<64x128xbf16>
    %cst = arith.constant dense<0.000000e+00> : vector<8x128xf32>
    %4 = tpu.matmul %1, %3, %cst {dimension_numbers = #tpu.dot_dimension_numbers<[1], [0], [0], [1], [0, 0, 1, 1], [], []>} : vector<8x64xbf16>, vector<64x128xbf16>, vector<8x128xf32> -> vector<8x128xf32>
    %cst_5 = arith.constant dense<0.000000e+00> : vector<128xf32>
    %5 = vector.multi_reduction <add>, %4, %cst_5 [0] : vector<8x128xf32> to vector<128xf32>
    %6 = vector.shape_cast %5 : vector<128xf32> to vector<1x128xf32>
    %cst_6 = arith.constant 8.000000e+00 : f32
    %7 = vector.broadcast %cst_6 : f32 to vector<1x128xf32>
    %8 = arith.divf %6, %7 : vector<1x128xf32>
    %9 = arith.mulf %4, %4 : vector<8x128xf32>
    %cst_7 = arith.constant dense<0.000000e+00> : vector<128xf32>
    %10 = vector.multi_reduction <add>, %9, %cst_7 [0] : vector<8x128xf32> to vector<128xf32>
    %11 = vector.shape_cast %10 : vector<128xf32> to vector<1x128xf32>
    %cst_8 = arith.constant 8.000000e+00 : f32
    %12 = vector.broadcast %cst_8 : f32 to vector<1x128xf32>
    %13 = arith.divf %11, %12 : vector<1x128xf32>
    %14 = arith.mulf %8, %8 : vector<1x128xf32>
    %15 = arith.subf %13, %14 : vector<1x128xf32>
    %c0_9 = arith.constant 0 : index
    %c0_10 = arith.constant 0 : index
    %c0_11 = arith.constant 0 : index
    %16 = vector.load %arg3[%c0_9, %c0_10, %c0_11] : memref<1x1x128xf32, #tpu.memory_space<vmem>>, vector<1x1x128xf32>
    %17 = vector.shape_cast %16 : vector<1x1x128xf32> to vector<1x128xf32>
    %cst_12 = arith.constant 9.99999974E-6 : f32
    %18 = vector.broadcast %cst_12 : f32 to vector<1x128xf32>
    %19 = arith.addf %15, %18 : vector<1x128xf32>
    %20 = math.rsqrt %19 : vector<1x128xf32>
    %21 = arith.mulf %17, %20 : vector<1x128xf32>
    %c0_13 = arith.constant 0 : index
    %c0_14 = arith.constant 0 : index
    %c0_15 = arith.constant 0 : index
    %22 = vector.load %arg4[%c0_13, %c0_14, %c0_15] : memref<1x1x128xf32, #tpu.memory_space<vmem>>, vector<1x1x128xf32>
    %23 = vector.shape_cast %22 : vector<1x1x128xf32> to vector<1x128xf32>
    %24 = arith.mulf %8, %21 : vector<1x128xf32>
    %25 = arith.subf %23, %24 : vector<1x128xf32>
    %26 = vector.broadcast %21 : vector<1x128xf32> to vector<8x128xf32>
    %27 = arith.mulf %4, %26 : vector<8x128xf32>
    %28 = vector.broadcast %25 : vector<1x128xf32> to vector<8x128xf32>
    %29 = arith.addf %27, %28 : vector<8x128xf32>
    %30 = arith.truncf %29 : vector<8x128xf32> to vector<8x128xbf16>
    %c0_16 = arith.constant 0 : index
    %c0_17 = arith.constant 0 : index
    %c0_18 = arith.constant 0 : index
    %31 = vector.load %arg5[%c0_16, %c0_17, %c0_18] : memref<1x128x128xbf16, #tpu.memory_space<vmem>>, vector<1x128x128xbf16>
    %32 = vector.shape_cast %31 : vector<1x128x128xbf16> to vector<128x128xbf16>
    %cst_19 = arith.constant dense<0.000000e+00> : vector<8x128xf32>
    %33 = tpu.matmul %30, %32, %cst_19 {dimension_numbers = #tpu.dot_dimension_numbers<[1], [0], [0], [1], [0, 0, 1, 1], [], []>} : vector<8x128xbf16>, vector<128x128xbf16>, vector<8x128xf32> -> vector<8x128xf32>
    %c0_20 = arith.constant 0 : index
    %c0_21 = arith.constant 0 : index
    %c0_22 = arith.constant 0 : index
    %34 = vector.load %arg6[%c0_20, %c0_21, %c0_22] : memref<1x1x128xf32, #tpu.memory_space<vmem>>, vector<1x1x128xf32>
    %35 = vector.shape_cast %34 : vector<1x1x128xf32> to vector<1x128xf32>
    %36 = vector.broadcast %35 : vector<1x128xf32> to vector<8x128xf32>
    %37 = arith.addf %33, %36 : vector<8x128xf32>
    %c0_23 = arith.constant 0 : index
    %c0_24 = arith.constant 0 : index
    %c0_25 = arith.constant 0 : index
    %38 = vector.load %arg7[%c0_23, %c0_24, %c0_25] : memref<1x8x128xf32, #tpu.memory_space<vmem>>, vector<1x8x128xf32>
    %39 = vector.shape_cast %38 : vector<1x8x128xf32> to vector<8x128xf32>
    %40 = vector.shape_cast %37 : vector<8x128xf32> to vector<1x8x128xf32>
    tpu.vector_store %arg7[%c0_23, %c0_24, %c0_25], %40 {strides = array<i32>} : memref<1x8x128xf32, #tpu.memory_space<vmem>>, vector<1x8x128xf32>,
    return
  }
  func.func @transform_0(%arg0: i32) -> (i32, i32, i32) {
    %c0_i32 = arith.constant 0 : i32
    %c0_i32_0 = arith.constant 0 : i32
    %c0_i32_1 = arith.constant 0 : i32
    return %arg0, %c0_i32, %c0_i32_0 : i32, i32, i32
  }
  func.func @transform_1(%arg0: i32) -> (i32, i32, i32) {
    %c0_i32 = arith.constant 0 : i32
    %c0_i32_0 = arith.constant 0 : i32
    %c0_i32_1 = arith.constant 0 : i32
    return %arg0, %c0_i32, %c0_i32_0 : i32, i32, i32
  }
  func.func @transform_2(%arg0: i32) -> (i32, i32, i32) {
    %c0_i32 = arith.constant 0 : i32
    %c0_i32_0 = arith.constant 0 : i32
    %c0_i32_1 = arith.constant 0 : i32
    return %arg0, %c0_i32, %c0_i32_0 : i32, i32, i32
  }
  func.func @transform_3(%arg0: i32) -> (i32, i32, i32) {
    %c0_i32 = arith.constant 0 : i32
    %c0_i32_0 = arith.constant 0 : i32
    %c0_i32_1 = arith.constant 0 : i32
    return %arg0, %c0_i32, %c0_i32_0 : i32, i32, i32
  }
  func.func @transform_4(%arg0: i32) -> (i32, i32, i32) {
    %c0_i32 = arith.constant 0 : i32
    %c0_i32_0 = arith.constant 0 : i32
    %c0_i32_1 = arith.constant 0 : i32
    return %arg0, %c0_i32, %c0_i32_0 : i32, i32, i32
  }
  func.func @transform_5(%arg0: i32) -> (i32, i32, i32) {
    %c0_i32 = arith.constant 0 : i32
    %c0_i32_0 = arith.constant 0 : i32
    %c0_i32_1 = arith.constant 0 : i32
    return %arg0, %c0_i32, %c0_i32_0 : i32, i32, i32
  }
  func.func @transform_6(%arg0: i32) -> (i32, i32, i32) {
    %c0_i32 = arith.constant 0 : i32
    %c0_i32_0 = arith.constant 0 : i32
    %c0_i32_1 = arith.constant 0 : i32
    return %arg0, %c0_i32, %c0_i32_0 : i32, i32, i32
  }
}

</mosaic_0001>

<llo_original>
// kernel: tpu_custom_call.1
$region0: #{tpu_custom_call.1}
  #allocation0 [shape = 'u32[]', space=smem, size = 0x4, offset = 0x4, fixed_abs, tag = 'smem constant byte address 0x4 - core index']
  #allocation1 [shape = 'u32[144,128]{1,0:T(1,128)}', space=vmem, size = 0x12000, scoped, tag = 'internal scratch']
  %s0 = inlined_call_operand.hbm [shape: bf16[1,8,64], index: 0, kind: input, shape index: {}]
  %s1 = inlined_call_operand.hbm [shape: bf16[1,64,128], index: 1, kind: input, shape index: {}]
  %s2 = inlined_call_operand.vmem [shape: f32[1,1,128], index: 2, kind: input, shape index: {}]
  %s3 = inlined_call_operand.vmem [shape: f32[1,1,128], index: 3, kind: input, shape index: {}]
  %s4 = inlined_call_operand.hbm [shape: bf16[1,128,128], index: 4, kind: input, shape index: {}]
  %s5 = inlined_call_operand.vmem [shape: f32[1,1,128], index: 5, kind: input, shape index: {}]
  %s6 = inlined_call_operand.hbm [shape: f32[1,8,128], index: 6, kind: output, shape index: {}]
  %s7 = sld [smem:[#allocation0]]
  $region46: #{tpu_custom_call.1} parent=0
    _
  %s9 = ssub.s32 1, %s7
  %s10 = scalar_select 0, %s9, %s7
  $region1: #{tpu_custom_call.1} parent=0
    #allocation2 [shape = 'u8[2048]{0}', space=vmem, size = 0x800, scoped, tag = 'input window, operand 0, single buffered']
    #allocation3 [shape = 's32[1]{0}', space=sflag, size = 0x4, scoped, tag = 'scoped memory for tpu_custom_call.1']
    #allocation4 [shape = 's32[1]{0}', space=sflag, size = 0x4, scoped, tag = 'scoped memory for tpu_custom_call.1']
    #allocation5 [shape = 'u8[16384]{0}', space=vmem, size = 0x4000, scoped, tag = 'input window, operand 1, single buffered']
    #allocation6 [shape = 's32[1]{0}', space=sflag, size = 0x4, scoped, tag = 'scoped memory for tpu_custom_call.1']
    #allocation7 [shape = 'u8[32768]{0}', space=vmem, size = 0x8000, scoped, tag = 'input window, operand 4, single buffered']
    #allocation8 [shape = 'u8[4096]{0}', space=vmem, size = 0x1000, scoped, tag = 'output window, operand 0, single buffered']
    %11 = vsyncpa [#allocation3], 0
    %12 = vsyncpa [#allocation6], 0
    %13 = vsyncpa [#allocation4], 0
    // Predicated region
    $region2: #{tpu_custom_call.1} parent=1 // pred_check
      _
    $region3: #{tpu_custom_call.1} parent=1 // pred_check_branch
      %15 = sbr.rel (0) target = $region5
    $region4: #{tpu_custom_call.1} parent=1 // pred_region
      %s17 = ssub.s32 64, 64
      %18 = vsyncadd [#allocation3], %s17
      %s20 = sshll.u32 [#allocation2], 4
      %s21 = int_to_ptr.vmem [resolvable:$true] %s20
      %23 = dma.hbm_to_vmem [thread:$0]  %s0, 64, %s21, [#allocation3]
    $region5: #{tpu_custom_call.1} parent=1 // pred_fallthru
      _
    // Predicated region
    $region6: #{tpu_custom_call.1} parent=1 // pred_check
      _
    $region7: #{tpu_custom_call.1} parent=1 // pred_check_branch
      %25 = sbr.rel (0) target = $region9
    $region8: #{tpu_custom_call.1} parent=1 // pred_region
      %s27 = ssub.s32 512, 512
      %28 = vsyncadd [#allocation6], %s27
      %s29 = sshll.u32 [#allocation5], 4
      %s30 = int_to_ptr.vmem [resolvable:$true] %s29
      %35 = dma.hbm_to_vmem [thread:$0]  %s1, 512, %s30, [#allocation6], 64, 64, 4
    $region9: #{tpu_custom_call.1} parent=1 // pred_fallthru
      _
    // Predicated region
    $region10: #{tpu_custom_call.1} parent=1 // pred_check
      _
    $region11: #{tpu_custom_call.1} parent=1 // pred_check_branch
      %37 = sbr.rel (0) target = $region13
    $region12: #{tpu_custom_call.1} parent=1 // pred_region
      _
    $region13: #{tpu_custom_call.1} parent=1 // pred_fallthru
      _
    // Predicated region
    $region14: #{tpu_custom_call.1} parent=1 // pred_check
      _
    $region15: #{tpu_custom_call.1} parent=1 // pred_check_branch
      %39 = sbr.rel (0) target = $region17
    $region16: #{tpu_custom_call.1} parent=1 // pred_region
      _
    $region17: #{tpu_custom_call.1} parent=1 // pred_fallthru
      _
    // Predicated region
    $region18: #{tpu_custom_call.1} parent=1 // pred_check
      _
    $region19: #{tpu_custom_call.1} parent=1 // pred_check_branch
      %41 = sbr.rel (0) target = $region21
    $region20: #{tpu_custom_call.1} parent=1 // pred_region
      %s43 = ssub.s32 1024, 1024
      %44 = vsyncadd [#allocation6], %s43
      %s45 = sshll.u32 [#allocation7], 4
      %s46 = int_to_ptr.vmem [resolvable:$true] %s45
      %51 = dma.hbm_to_vmem [thread:$0]  %s4, 1024, %s46, [#allocation6], 64, 64, 4
    $region21: #{tpu_custom_call.1} parent=1 // pred_fallthru
      _
    // Predicated region
    $region22: #{tpu_custom_call.1} parent=1 // pred_check
      _
    $region23: #{tpu_custom_call.1} parent=1 // pred_check_branch
      %53 = sbr.rel (0) target = $region25
    $region24: #{tpu_custom_call.1} parent=1 // pred_region
      _
    $region25: #{tpu_custom_call.1} parent=1 // pred_fallthru
      _
    // Predicated region
    $region26: #{tpu_custom_call.1} parent=1 // pred_check
      _
    $region27: #{tpu_custom_call.1} parent=1 // pred_check_branch
      %55 = sbr.rel (0) target = $region29
    $region28: #{tpu_custom_call.1} parent=1 // pred_region
      %56 = dma.done [#allocation3], 64
    $region29: #{tpu_custom_call.1} parent=1 // pred_fallthru
      _
    // Predicated region
    $region30: #{tpu_custom_call.1} parent=1 // pred_check
      _
    $region31: #{tpu_custom_call.1} parent=1 // pred_check_branch
      %58 = sbr.rel (0) target = $region33
    $region32: #{tpu_custom_call.1} parent=1 // pred_region
      %59 = dma.done [#allocation6], 512
    $region33: #{tpu_custom_call.1} parent=1 // pred_fallthru
      _
    // Predicated region
    $region34: #{tpu_custom_call.1} parent=1 // pred_check
      _
    $region35: #{tpu_custom_call.1} parent=1 // pred_check_branch
      %61 = sbr.rel (0) target = $region37
    $region36: #{tpu_custom_call.1} parent=1 // pred_region
      %62 = dma.done [#allocation6], 1024
    $region37: #{tpu_custom_call.1} parent=1 // pred_fallthru
      _
    %v64 = vld [vmem:[#allocation2] sm:$0xf]
    %v65 = vld [vmem:[#allocation5] sm:$0xf]
    %v66 = vld [vmem:[#allocation5 + $0x4] sm:$0xf]
    %v67 = vld [vmem:[#allocation5 + $0x8] sm:$0xf]
    %v68 = vld [vmem:[#allocation5 + $0xc] sm:$0xf]
    %v69 = vld [vmem:[#allocation5 + $0x10] sm:$0xf]
    %v70 = vld [vmem:[#allocation5 + $0x14] sm:$0xf]
    %v71 = vld [vmem:[#allocation5 + $0x18] sm:$0xf]
    %v72 = vld [vmem:[#allocation5 + $0x1c] sm:$0xf]
    %v81 = vunpack.c.l.b16 %v65
    %v82 = vunpack.c.l.b16 %v66
    %v83 = vunpack.c.l.b16 %v67
    %v84 = vunpack.c.l.b16 %v68
    %v85 = vunpack.c.l.b16 %v69
    %v86 = vunpack.c.l.b16 %v70
    %v87 = vunpack.c.l.b16 %v71
    %v88 = vunpack.c.l.b16 %v72
    %v89 = vpack.c.b16 %v82, %v81
    %v90 = vpack.c.b16 %v84, %v83
    %v91 = vpack.c.b16 %v86, %v85
    %v92 = vpack.c.b16 %v88, %v87
    %vm97 = vcmask 523264
    %v99 = vsel %vm97, %v64, 0
    %101 = vmatprep.subr.bf16.mxu0 0
    %102 = vmatpush1.bf16.msra.mxu0 %v89
    %103 = vmatprep.subr.bf16.mxu0 0
    %104 = vmatpush1.bf16.msra.mxu0 %v90
    %105 = vmatprep.subr.bf16.mxu0 0
    %106 = vmatpush1.bf16.msra.mxu0 %v91
    %107 = vmatprep.subr.bf16.mxu0 0
    %108 = vmatpush1.bf16.msra.mxu0 %v92
    %109 = vmatprep.subr.bf16.mxu0 0
    %110 = vmatpush1.bf16.msra.mxu0 0
    %111 = vmatprep.subr.bf16.mxu0 0
    %112 = vmatpush1.bf16.msra.mxu0 0
    %113 = vmatprep.subr.bf16.mxu0 0
    %114 = vmatpush1.bf16.msra.mxu0 0
    %115 = vmatprep.subr.bf16.mxu0 0
    %116 = vmatpush1.bf16.msra.mxu0 0
    %117 = vmatprep.subr.bf16.mxu0 0
    %118 = vmatpush1.bf16.msra.mxu0 0
    %119 = vmatprep.subr.bf16.mxu0 0
    %120 = vmatpush1.bf16.msra.mxu0 0
    %121 = vmatprep.subr.bf16.mxu0 0
    %122 = vmatpush1.bf16.msra.mxu0 0
    %123 = vmatprep.subr.bf16.mxu0 0
    %124 = vmatpush1.bf16.msra.mxu0 0
    %125 = vmatprep.subr.bf16.mxu0 0
    %126 = vmatpush1.bf16.msra.mxu0 0
    %127 = vmatprep.subr.bf16.mxu0 0
    %128 = vmatpush1.bf16.msra.mxu0 0
    %129 = vmatprep.subr.bf16.mxu0 0
    %130 = vmatpush1.bf16.msra.mxu0 0
    %131 = vmatprep.subr.bf16.mxu0 0
    %132 = vmatpush1.bf16.msra.mxu0 0
    %133 = vmatprep.mubr.bf16.mxu0 0
    %134 = vmatmul.mubr.bf16.gmra.mrb[0].mxu0 %v99
    %v135 = vpop.f32.mrb[0].mxu0
    %v136 = vadd.f32 0.0, %v135
    %v137 = vpop.f32.mrb[0].mxu0
    %v138 = vpop.f32.mrb[0].mxu0
    %v139 = vpop.f32.mrb[0].mxu0
    %140 = vdwg.mxu0
    %v141 = vrot.slane %v136, 4
    %v142 = vadd.f32 %v136, %v141
    %v143 = vrot.slane %v142, 2
    %v144 = vadd.f32 %v142, %v143
    %v145 = vrot.slane %v144, 1
    %v146 = vadd.f32 %v144, %v145
    %v147 = vrcp.pop 8.0
    %v148 = vmul.f32 %v146, %v147
    %v149 = vmul.f32 %v136, %v136
    %v150 = vrot.slane %v149, 4
    %v151 = vadd.f32 %v149, %v150
    %v152 = vrot.slane %v151, 2
    %v153 = vadd.f32 %v151, %v152
    %v154 = vrot.slane %v153, 1
    %v155 = vadd.f32 %v153, %v154
    %v156 = vmul.f32 %v155, %v147
    %v157 = vmul.f32 %v148, %v148
    %v158 = vsub.f32 %v156, %v157
    %v159 = vld [vmem:[%s2] sm:$0x1]
    %v160 = vadd.f32 %v158, 1e-05
    %v161 = vrsqrt.pop %v160
    %v162 = vmul.f32 %v159, %v161
    %v163 = vld [vmem:[%s3] sm:$0x1]
    %v164 = vmul.f32 %v148, %v162
    %v165 = vsub.f32 %v163, %v164
    %v167 = vlaneseq
    %v168 = vshrl.u32 %v167, 7
    %v169 = vsub.s32 0, %v168
    %v170 = vrot.slane %v162, %v169
    %v172 = vmul.f32 %v136, %v170
    %v174 = vlaneseq
    %v175 = vshrl.u32 %v174, 7
    %v176 = vsub.s32 0, %v175
    %v177 = vrot.slane %v165, %v176
    %v179 = vadd.f32 %v172, %v177
    %v180 = vpack.c.bf16 %v179, %v179
    %v181 = vld [vmem:[#allocation7] sm:$0xf]
    %v182 = vld [vmem:[#allocation7 + $0x4] sm:$0xf]
    %v183 = vld [vmem:[#allocation7 + $0x8] sm:$0xf]
    %v184 = vld [vmem:[#allocation7 + $0xc] sm:$0xf]
    %v185 = vld [vmem:[#allocation7 + $0x10] sm:$0xf]
    %v186 = vld [vmem:[#allocation7 + $0x14] sm:$0xf]
    %v187 = vld [vmem:[#allocation7 + $0x18] sm:$0xf]
    %v188 = vld [vmem:[#allocation7 + $0x1c] sm:$0xf]
    %v189 = vld [vmem:[#allocation7 + $0x20] sm:$0xf]
    %v190 = vld [vmem:[#allocation7 + $0x24] sm:$0xf]
    %v191 = vld [vmem:[#allocation7 + $0x28] sm:$0xf]
    %v192 = vld [vmem:[#allocation7 + $0x2c] sm:$0xf]
    %v193 = vld [vmem:[#allocation7 + $0x30] sm:$0xf]
    %v194 = vld [vmem:[#allocation7 + $0x34] sm:$0xf]
    %v195 = vld [vmem:[#allocation7 + $0x38] sm:$0xf]
    %v196 = vld [vmem:[#allocation7 + $0x3c] sm:$0xf]
    %v197 = vld [vmem:[%s5] sm:$0x1]
    %v199 = vlaneseq
    %v200 = vshrl.u32 %v199, 7
    %v201 = vsub.s32 0, %v200
    %v202 = vrot.slane %v197, %v201
    %v220 = vunpack.c.l.b16 %v181
    %v221 = vunpack.c.l.b16 %v182
    %v222 = vunpack.c.l.b16 %v183
    %v223 = vunpack.c.l.b16 %v184
    %v224 = vunpack.c.l.b16 %v185
    %v225 = vunpack.c.l.b16 %v186
    %v226 = vunpack.c.l.b16 %v187
    %v227 = vunpack.c.l.b16 %v188
    %v228 = vunpack.c.l.b16 %v189
    %v229 = vunpack.c.l.b16 %v190
    %v230 = vunpack.c.l.b16 %v191
    %v231 = vunpack.c.l.b16 %v192
    %v232 = vunpack.c.l.b16 %v193
    %v233 = vunpack.c.l.b16 %v194
    %v234 = vunpack.c.l.b16 %v195
    %v235 = vunpack.c.l.b16 %v196
    %v236 = vpack.c.b16 %v221, %v220
    %v237 = vpack.c.b16 %v223, %v222
    %v238 = vpack.c.b16 %v225, %v224
    %v239 = vpack.c.b16 %v227, %v226
    %v240 = vpack.c.b16 %v229, %v228
    %v241 = vpack.c.b16 %v231, %v230
    %v242 = vpack.c.b16 %v233, %v232
    %v243 = vpack.c.b16 %v235, %v234
    %252 = vmatprep.subr.bf16.mxu0 0
    %253 = vmatpush1.bf16.msra.mxu0 %v236
    %254 = vmatprep.subr.bf16.mxu0 0
    %255 = vmatpush1.bf16.msra.mxu0 %v237
    %256 = vmatprep.subr.bf16.mxu0 0
    %257 = vmatpush1.bf16.msra.mxu0 %v238
    %258 = vmatprep.subr.bf16.mxu0 0
    %259 = vmatpush1.bf16.msra.mxu0 %v239
    %260 = vmatprep.subr.bf16.mxu0 0
    %261 = vmatpush1.bf16.msra.mxu0 %v240
    %262 = vmatprep.subr.bf16.mxu0 0
    %263 = vmatpush1.bf16.msra.mxu0 %v241
    %264 = vmatprep.subr.bf16.mxu0 0
    %265 = vmatpush1.bf16.msra.mxu0 %v242
    %266 = vmatprep.subr.bf16.mxu0 0
    %267 = vmatpush1.bf16.msra.mxu0 %v243
    %268 = vmatprep.subr.bf16.mxu0 0
    %269 = vmatpush1.bf16.msra.mxu0 0
    %270 = vmatprep.subr.bf16.mxu0 0
    %271 = vmatpush1.bf16.msra.mxu0 0
    %272 = vmatprep.subr.bf16.mxu0 0
    %273 = vmatpush1.bf16.msra.mxu0 0
    %274 = vmatprep.subr.bf16.mxu0 0
    %275 = vmatpush1.bf16.msra.mxu0 0
    %276 = vmatprep.subr.bf16.mxu0 0
    %277 = vmatpush1.bf16.msra.mxu0 0
    %278 = vmatprep.subr.bf16.mxu0 0
    %279 = vmatpush1.bf16.msra.mxu0 0
    %280 = vmatprep.subr.bf16.mxu0 0
    %281 = vmatpush1.bf16.msra.mxu0 0
    %282 = vmatprep.subr.bf16.mxu0 0
    %283 = vmatpush1.bf16.msra.mxu0 0
    %284 = vmatprep.mubr.bf16.mxu0 0
    %285 = vmatmul.mubr.bf16.gmra.mrb[0].mxu0 %v180
    %v286 = vpop.f32.mrb[0].mxu0
    %v287 = vadd.f32 %v202, %v286
    %v288 = vpop.f32.mrb[0].mxu0
    %v289 = vpop.f32.mrb[0].mxu0
    %v290 = vpop.f32.mrb[0].mxu0
    %291 = vdwg.mxu0
    %292 = vst [vmem:[#allocation8] sm:$0xff] %v287
    // Predicated region
    $region38: #{tpu_custom_call.1} parent=1 // pred_check
      _
    $region39: #{tpu_custom_call.1} parent=1 // pred_check_branch
      %294 = sbr.rel (0) target = $region41
    $region40: #{tpu_custom_call.1} parent=1 // pred_region
      %s296 = ssub.s32 128, 128
      %297 = vsyncadd [#allocation4], %s296
      %s299 = sshll.u32 [#allocation8], 4
      %s300 = int_to_ptr.vmem [resolvable:$true] %s299
      %302 = dma.vmem_to_hbm [thread:$0]  %s300, 128, %s6, [#allocation4]
    $region41: #{tpu_custom_call.1} parent=1 // pred_fallthru
      _
    // Predicated region
    $region42: #{tpu_custom_call.1} parent=1 // pred_check
      _
    $region43: #{tpu_custom_call.1} parent=1 // pred_check_branch
      %304 = sbr.rel (0) target = $region45
    $region44: #{tpu_custom_call.1} parent=1 // pred_region
      %305 = dma.done [#allocation4], 128
    $region45: #{tpu_custom_call.1} parent=1 // pred_fallthru
      _
    %306 = vsyncpa [#allocation3], 1
    %307 = vsyncpa [#allocation6], 1
    %308 = vsyncpa [#allocation4], 1

</llo_original>
